<compile_context>
chip_gen: v5e
topology: v5e:2x2
jax: 0.10.0
libtpu: 0.0.40
codegen_flags: <defaults>
</compile_context>

<pallas_src>
import jax
import jax.numpy as jnp
import numpy as np
from jax.experimental import pallas as pl
from jax.experimental.pallas import tpu as pltpu

TAU = 2.0          # LIFNode default tau
V_THRESHOLD = 1.0  # SpikingWrapper default v_threshold
V_RESET = 0.0      # LIFNode default v_reset
LANES = 128        # TPU lane width
TILE_R = 512       # flattened pixel rows per grid step (multiple of 8)


def _spiking_matmul_kernel(p_ref, w_ref, thr_ref, o_ref):
    """Pure MXU matmul + LIF fire on one row tile.

    p_ref:   (TILE_R, K_pad)     bf16 im2col patch rows (lane-dense, K zero-padded to 128)
    w_ref:   (K_pad, Cout_pad)   bf16 tap-major weights, Cout zero-padded to 128 lanes
    thr_ref: (1, Cout_pad)       f32 folded firing threshold: tau*v_th - v_reset - bias
    o_ref:   (TILE_R, Cout_pad)  bf16 spikes (0.0 / 1.0), lane-dense unmasked stores
    """
    acc = jnp.dot(p_ref[...], w_ref[...], preferred_element_type=jnp.float32)
    #   spike = ((acc + bias + v_reset)/tau >= v_th)  <=>  acc >= tau*v_th - v_reset - bias
    o_ref[...] = (acc >= thr_ref[...]).astype(o_ref.dtype)


@jax.jit
def spiking_wrapper_forward(x_nchw, w_oihw, bias):
    """Forward of SpikingWrapper(Conv2d(Cin, Cout, 3, padding=1), LIFNode()).

    x_nchw: (N, Cin, H, W) float32
    w_oihw: (Cout, Cin, KH, KW) float32
    bias:   (Cout,) float32
    returns spikes, (N, Cout, H, W) float32 of 0/1.
    """
    N, Cin, H, W = x_nchw.shape
    Cout, _, KH, KW = w_oihw.shape
    ph, pw = (KH - 1) // 2, (KW - 1) // 2

    K = KH * KW * Cin
    k_pad = -(-K // LANES) * LANES             # contraction dim rounded to 128
    cout_pad = -(-Cout // LANES) * LANES       # output channels rounded to 128 lanes
    rows = N * H * W
    rows_pad = -(-rows // TILE_R) * TILE_R     # row dim rounded to the tile size

    # ---- wrapper-side im2col (fused by XLA): lane-dense (rows, K_pad) bf16 patch ----
    x_nhwc = jnp.transpose(x_nchw, (0, 2, 3, 1))
    x_sp = jnp.pad(x_nhwc, ((0, 0), (ph, ph), (pw, pw), (0, 0)))
    cols = [x_sp[:, dy:dy + H, dx:dx + W, :] for dy in range(KH) for dx in range(KW)]
    patch = jnp.concatenate(cols, axis=-1).reshape(rows, K)
    patch = jnp.pad(patch, ((0, rows_pad - rows), (0, k_pad - K))).astype(jnp.bfloat16)

    # (Cout, Cin, KH, KW) -> (K, Cout) tap-major (matches patch column order), K/Cout padded.
    w_mat = jnp.transpose(w_oihw, (2, 3, 1, 0)).reshape(K, Cout)
    w_mat = jnp.pad(w_mat, ((0, k_pad - K), (0, cout_pad - Cout))).astype(jnp.bfloat16)

    # Folded threshold; padded channels/rows see acc=0 < tau*v_th -> never spike (and are
    # sliced off anyway).
    thr = (TAU * V_THRESHOLD - V_RESET) - jnp.pad(bias, (0, cout_pad - Cout))
    thr = thr.reshape(1, cout_pad).astype(jnp.float32)

    grid = (rows_pad // TILE_R,)
    out = pl.pallas_call(
        _spiking_matmul_kernel,
        out_shape=jax.ShapeDtypeStruct((rows_pad, cout_pad), jnp.bfloat16),
        grid=grid,
        in_specs=[
            pl.BlockSpec((TILE_R, k_pad), lambda r: (r, 0)),
            pl.BlockSpec((k_pad, cout_pad), lambda r: (0, 0)),   # resident, not re-DMA'd
            pl.BlockSpec((1, cout_pad), lambda r: (0, 0)),       # resident, not re-DMA'd
        ],
        out_specs=pl.BlockSpec((TILE_R, cout_pad), lambda r: (r, 0)),
        compiler_params=pltpu.CompilerParams(
            dimension_semantics=("parallel",),   # row tiles shard across v7x's 2 TCs
            # Per-step footprint (double-buffered patch + output tile, resident weights,
            # f32 acc) is well under 2 MiB at TILE_R=512; 32 MiB leaves huge headroom on
            # every chip (v7x 64 MiB physical included).
            vmem_limit_bytes=32 * 1024 * 1024,
        ),
    )(patch, w_mat, thr)

    # Strip row/channel padding, back to NCHW float32 (fuses with the transpose).
    out = out[:rows, :Cout].reshape(N, H, W, Cout).astype(jnp.float32)
    return jnp.transpose(out, (0, 3, 1, 2))


def _reference_membrane(x_nchw, w_oihw, bias):
    """Pure-JAX f32 reference: conv2d + LIF single-step membrane potential."""
    conv = jax.lax.conv_general_dilated(
        x_nchw, w_oihw, window_strides=(1, 1), padding=((1, 1), (1, 1)),
        dimension_numbers=("NCHW", "OIHW", "NCHW"),
    ) + bias[None, :, None, None]
    return (conv + V_RESET) / TAU


if __name__ == "__main__":
    # Deterministic synthetic inputs; shapes from Conv2d(4, 8, 3, padding=1).
    key = jax.random.PRNGKey(0)
    kx, kw, kb = jax.random.split(key, 3)

    N, Cin, H, W, Cout = 2, 4, 16, 16, 8
    x = jax.random.normal(kx, (N, Cin, H, W), dtype=jnp.float32) * 2.0
    fan_in = Cin * 3 * 3
    w = jax.random.normal(kw, (Cout, Cin, 3, 3), dtype=jnp.float32) / np.sqrt(fan_in)
    b = jax.random.normal(kb, (Cout,), dtype=jnp.float32) * 0.1

    spikes = spiking_wrapper_forward(x, w, b)
    jax.block_until_ready(spikes)

    # Tolerance policy (hard-threshold + bf16 operands): spikes must match the f32 reference
    # exactly everywhere the membrane potential is clearly away from the threshold; only
    # near-threshold pixels (|v - v_th| < band, covering bf16 operand rounding) may flip,
    # and the overall disagreement rate must stay tiny.
    v_ref = np.asarray(_reference_membrane(x, w, b))
    ref_spk = (v_ref >= V_THRESHOLD).astype(np.float32)
    spk = np.asarray(spikes)

    band = 0.05
    mismatch = spk != ref_spk
    near_thr = np.abs(v_ref - V_THRESHOLD) < band
    assert spk.shape == ref_spk.shape
    assert np.all(np.isin(spk, (0.0, 1.0)))
    assert np.all(~mismatch | near_thr), "spike flip outside near-threshold band"
    assert mismatch.mean() < 0.05, f"spike disagreement rate too high: {mismatch.mean():.4f}"

    print("KERNEL_OK")
</pallas_src>

<mosaic_0001>
module attributes {stable_mosaic.version = 11 : i64} {
  func.func @_spiking_matmul_kernel(%arg0: i32, %arg1: memref<512x128xbf16, #tpu.memory_space<vmem>>, %arg2: memref<128x128xbf16, #tpu.memory_space<vmem>>, %arg3: memref<1x128xf32, #tpu.memory_space<vmem>>, %arg4: memref<512x128xbf16, #tpu.memory_space<vmem>>) attributes {dimension_semantics = [#tpu.dimension_semantics<parallel>], iteration_bounds = array<i64: 1>, scalar_prefetch = 0 : i64, scratch_operands = 0 : i64, tpu.core_type = #tpu.core_type<tc>, window_params = [{transform_indices = @transform_0, window_bounds = array<i64: 512, 128>}, {pipeline_mode = #tpu.pipeline_mode<synchronous>, transform_indices = @transform_1, window_bounds = array<i64: 128, 128>}, {pipeline_mode = #tpu.pipeline_mode<synchronous>, transform_indices = @transform_2, window_bounds = array<i64: 1, 128>}, {transform_indices = @transform_3, window_bounds = array<i64: 512, 128>}]} {
    %c0 = arith.constant 0 : index
    %c0_0 = arith.constant 0 : index
    %0 = vector.load %arg1[%c0, %c0_0] : memref<512x128xbf16, #tpu.memory_space<vmem>>, vector<512x128xbf16>
    %c0_1 = arith.constant 0 : index
    %c0_2 = arith.constant 0 : index
    %1 = vector.load %arg2[%c0_1, %c0_2] : memref<128x128xbf16, #tpu.memory_space<vmem>>, vector<128x128xbf16>
    %cst = arith.constant dense<0.000000e+00> : vector<512x128xf32>
    %2 = tpu.matmul %0, %1, %cst {dimension_numbers = #tpu.dot_dimension_numbers<[1], [0], [0], [1], [0, 0, 1, 1], [], []>} : vector<512x128xbf16>, vector<128x128xbf16>, vector<512x128xf32> -> vector<512x128xf32>
    %c0_3 = arith.constant 0 : index
    %c0_4 = arith.constant 0 : index
    %3 = vector.load %arg3[%c0_3, %c0_4] : memref<1x128xf32, #tpu.memory_space<vmem>>, vector<1x128xf32>
    %4 = vector.broadcast %3 : vector<1x128xf32> to vector<512x128xf32>
    %5 = arith.cmpf oge, %2, %4 : vector<512x128xf32>
    %6 = arith.extui %5 : vector<512x128xi1> to vector<512x128xi32>
    %7 = arith.sitofp %6 : vector<512x128xi32> to vector<512x128xf32>
    %8 = arith.truncf %7 : vector<512x128xf32> to vector<512x128xbf16>
    %c0_5 = arith.constant 0 : index
    %c0_6 = arith.constant 0 : index
    %9 = vector.load %arg4[%c0_5, %c0_6] : memref<512x128xbf16, #tpu.memory_space<vmem>>, vector<512x128xbf16>
    tpu.vector_store %arg4[%c0_5, %c0_6], %8 {strides = array<i32>} : memref<512x128xbf16, #tpu.memory_space<vmem>>, vector<512x128xbf16>,
    return
  }
  func.func @transform_0(%arg0: i32) -> (i32, i32) {
    %c0_i32 = arith.constant 0 : i32
    %c0_i32_0 = arith.constant 0 : i32
    return %arg0, %c0_i32 : i32, i32
  }
  func.func @transform_1(%arg0: i32) -> (i32, i32) {
    %c0_i32 = arith.constant 0 : i32
    %c0_i32_0 = arith.constant 0 : i32
    %c0_i32_1 = arith.constant 0 : i32
    return %c0_i32, %c0_i32_0 : i32, i32
  }
  func.func @transform_2(%arg0: i32) -> (i32, i32) {
    %c0_i32 = arith.constant 0 : i32
    %c0_i32_0 = arith.constant 0 : i32
    %c0_i32_1 = arith.constant 0 : i32
    return %c0_i32, %c0_i32_0 : i32, i32
  }
  func.func @transform_3(%arg0: i32) -> (i32, i32) {
    %c0_i32 = arith.constant 0 : i32
    %c0_i32_0 = arith.constant 0 : i32
    return %arg0, %c0_i32 : i32, i32
  }
}

</mosaic_0001>

<llo_original>
// kernel: spiking_wrapper_forward.1
$region0: #{spiking_wrapper_forward.1}
  #allocation0 [shape = 'u32[]', space=smem, size = 0x4, offset = 0x4, fixed_abs, tag = 'smem constant byte address 0x4 - core index']
  #allocation1 [shape = 'u32[72,128]{1,0:T(1,128)}', space=vmem, size = 0x9000, scoped, tag = 'internal scratch']
  %s0 = inlined_call_operand.vmem [shape: bf16[512,128], index: 0, kind: input, shape index: {}]
  %s1 = inlined_call_operand.vmem [shape: bf16[128,128], index: 1, kind: input, shape index: {}]
  %s2 = inlined_call_operand.vmem [shape: f32[1,128], index: 2, kind: input, shape index: {}]
  %s3 = inlined_call_operand.vmem [shape: bf16[512,128], index: 3, kind: output, shape index: {}]
  %s4 = sld [smem:[#allocation0]]
  $region22: #{spiking_wrapper_forward.1} parent=0
    _
  %s6 = ssub.s32 1, %s4
  %s7 = scalar_select 0, %s6, %s4
  // Predicated region
  $region2: #{spiking_wrapper_forward.1} parent=0 // pred_check
    _
  $region3: #{spiking_wrapper_forward.1} parent=0 // pred_check_branch
    %9 = sbr.rel (0) target = $region5
  $region4: #{spiking_wrapper_forward.1} parent=0 // pred_region
    _
  $region5: #{spiking_wrapper_forward.1} parent=0 // pred_fallthru
    _
  // Predicated region
  $region6: #{spiking_wrapper_forward.1} parent=0 // pred_check
    _
  $region7: #{spiking_wrapper_forward.1} parent=0 // pred_check_branch
    %11 = sbr.rel (0) target = $region9
  $region8: #{spiking_wrapper_forward.1} parent=0 // pred_region
    _
  $region9: #{spiking_wrapper_forward.1} parent=0 // pred_fallthru
    _
  // Predicated region
  $region10: #{spiking_wrapper_forward.1} parent=0 // pred_check
    _
  $region11: #{spiking_wrapper_forward.1} parent=0 // pred_check_branch
    %13 = sbr.rel (0) target = $region13
  $region12: #{spiking_wrapper_forward.1} parent=0 // pred_region
    _
  $region13: #{spiking_wrapper_forward.1} parent=0 // pred_fallthru
    _
  %v14 = vld [vmem:[%s0] sm:$0xf]
  %v15 = vld [vmem:[%s0 + $0x4] sm:$0xf]
  %v16 = vld [vmem:[%s0 + $0x8] sm:$0xf]
  %v17 = vld [vmem:[%s0 + $0xc] sm:$0xf]
  %v18 = vld [vmem:[%s0 + $0x10] sm:$0xf]
  %v19 = vld [vmem:[%s0 + $0x14] sm:$0xf]
  %v20 = vld [vmem:[%s0 + $0x18] sm:$0xf]
  %v21 = vld [vmem:[%s0 + $0x1c] sm:$0xf]
  %v22 = vld [vmem:[%s0 + $0x20] sm:$0xf]
  %v23 = vld [vmem:[%s0 + $0x24] sm:$0xf]
  %v24 = vld [vmem:[%s0 + $0x28] sm:$0xf]
  %v25 = vld [vmem:[%s0 + $0x2c] sm:$0xf]
  %v26 = vld [vmem:[%s0 + $0x30] sm:$0xf]
  %v27 = vld [vmem:[%s0 + $0x34] sm:$0xf]
  %v28 = vld [vmem:[%s0 + $0x38] sm:$0xf]
  %v29 = vld [vmem:[%s0 + $0x3c] sm:$0xf]
  %v30 = vld [vmem:[%s0 + $0x40] sm:$0xf]
  %v31 = vld [vmem:[%s0 + $0x44] sm:$0xf]
  %v32 = vld [vmem:[%s0 + $0x48] sm:$0xf]
  %v33 = vld [vmem:[%s0 + $0x4c] sm:$0xf]
  %v34 = vld [vmem:[%s0 + $0x50] sm:$0xf]
  %v35 = vld [vmem:[%s0 + $0x54] sm:$0xf]
  %v36 = vld [vmem:[%s0 + $0x58] sm:$0xf]
  %v37 = vld [vmem:[%s0 + $0x5c] sm:$0xf]
  %v38 = vld [vmem:[%s0 + $0x60] sm:$0xf]
  %v39 = vld [vmem:[%s0 + $0x64] sm:$0xf]
  %v40 = vld [vmem:[%s0 + $0x68] sm:$0xf]
  %v41 = vld [vmem:[%s0 + $0x6c] sm:$0xf]
  %v42 = vld [vmem:[%s0 + $0x70] sm:$0xf]
  %v43 = vld [vmem:[%s0 + $0x74] sm:$0xf]
  %v44 = vld [vmem:[%s0 + $0x78] sm:$0xf]
  %v45 = vld [vmem:[%s0 + $0x7c] sm:$0xf]
  %v46 = vld [vmem:[%s0 + $0x80] sm:$0xf]
  %v47 = vld [vmem:[%s0 + $0x84] sm:$0xf]
  %v48 = vld [vmem:[%s0 + $0x88] sm:$0xf]
  %v49 = vld [vmem:[%s0 + $0x8c] sm:$0xf]
  %v50 = vld [vmem:[%s0 + $0x90] sm:$0xf]
  %v51 = vld [vmem:[%s0 + $0x94] sm:$0xf]
  %v52 = vld [vmem:[%s0 + $0x98] sm:$0xf]
  %v53 = vld [vmem:[%s0 + $0x9c] sm:$0xf]
  %v54 = vld [vmem:[%s0 + $0xa0] sm:$0xf]
  %v55 = vld [vmem:[%s0 + $0xa4] sm:$0xf]
  %v56 = vld [vmem:[%s0 + $0xa8] sm:$0xf]
  %v57 = vld [vmem:[%s0 + $0xac] sm:$0xf]
  %v58 = vld [vmem:[%s0 + $0xb0] sm:$0xf]
  %v59 = vld [vmem:[%s0 + $0xb4] sm:$0xf]
  %v60 = vld [vmem:[%s0 + $0xb8] sm:$0xf]
  %v61 = vld [vmem:[%s0 + $0xbc] sm:$0xf]
  %v62 = vld [vmem:[%s0 + $0xc0] sm:$0xf]
  %v63 = vld [vmem:[%s0 + $0xc4] sm:$0xf]
  %v64 = vld [vmem:[%s0 + $0xc8] sm:$0xf]
  %v65 = vld [vmem:[%s0 + $0xcc] sm:$0xf]
  %v66 = vld [vmem:[%s0 + $0xd0] sm:$0xf]
  %v67 = vld [vmem:[%s0 + $0xd4] sm:$0xf]
  %v68 = vld [vmem:[%s0 + $0xd8] sm:$0xf]
  %v69 = vld [vmem:[%s0 + $0xdc] sm:$0xf]
  %v70 = vld [vmem:[%s0 + $0xe0] sm:$0xf]
  %v71 = vld [vmem:[%s0 + $0xe4] sm:$0xf]
  %v72 = vld [vmem:[%s0 + $0xe8] sm:$0xf]
  %v73 = vld [vmem:[%s0 + $0xec] sm:$0xf]
  %v74 = vld [vmem:[%s0 + $0xf0] sm:$0xf]
  %v75 = vld [vmem:[%s0 + $0xf4] sm:$0xf]
  %v76 = vld [vmem:[%s0 + $0xf8] sm:$0xf]
  %v77 = vld [vmem:[%s0 + $0xfc] sm:$0xf]
  %v78 = vld [vmem:[%s1] sm:$0xf]
  %v79 = vld [vmem:[%s1 + $0x4] sm:$0xf]
  %v80 = vld [vmem:[%s1 + $0x8] sm:$0xf]
  %v81 = vld [vmem:[%s1 + $0xc] sm:$0xf]
  %v82 = vld [vmem:[%s1 + $0x10] sm:$0xf]
  %v83 = vld [vmem:[%s1 + $0x14] sm:$0xf]
  %v84 = vld [vmem:[%s1 + $0x18] sm:$0xf]
  %v85 = vld [vmem:[%s1 + $0x1c] sm:$0xf]
  %v86 = vld [vmem:[%s1 + $0x20] sm:$0xf]
  %v87 = vld [vmem:[%s1 + $0x24] sm:$0xf]
  %v88 = vld [vmem:[%s1 + $0x28] sm:$0xf]
  %v89 = vld [vmem:[%s1 + $0x2c] sm:$0xf]
  %v90 = vld [vmem:[%s1 + $0x30] sm:$0xf]
  %v91 = vld [vmem:[%s1 + $0x34] sm:$0xf]
  %v92 = vld [vmem:[%s1 + $0x38] sm:$0xf]
  %v93 = vld [vmem:[%s1 + $0x3c] sm:$0xf]
  %v158 = vunpack.c.l.b16 %v14
  %v159 = vunpack.c.l.b16 %v15
  %v160 = vunpack.c.l.b16 %v16
  %v161 = vunpack.c.l.b16 %v17
  %v162 = vunpack.c.l.b16 %v18
  %v163 = vunpack.c.l.b16 %v19
  %v164 = vunpack.c.l.b16 %v20
  %v165 = vunpack.c.l.b16 %v21
  %v166 = vunpack.c.l.b16 %v22
  %v167 = vunpack.c.l.b16 %v23
  %v168 = vunpack.c.l.b16 %v24
  %v169 = vunpack.c.l.b16 %v25
  %v170 = vunpack.c.l.b16 %v26
  %v171 = vunpack.c.l.b16 %v27
  %v172 = vunpack.c.l.b16 %v28
  %v173 = vunpack.c.l.b16 %v29
  %v174 = vunpack.c.l.b16 %v30
  %v175 = vunpack.c.l.b16 %v31
  %v176 = vunpack.c.l.b16 %v32
  %v177 = vunpack.c.l.b16 %v33
  %v178 = vunpack.c.l.b16 %v34
  %v179 = vunpack.c.l.b16 %v35
  %v180 = vunpack.c.l.b16 %v36
  %v181 = vunpack.c.l.b16 %v37
  %v182 = vunpack.c.l.b16 %v38
  %v183 = vunpack.c.l.b16 %v39
  %v184 = vunpack.c.l.b16 %v40
  %v185 = vunpack.c.l.b16 %v41
  %v186 = vunpack.c.l.b16 %v42
  %v187 = vunpack.c.l.b16 %v43
  %v188 = vunpack.c.l.b16 %v44
  %v189 = vunpack.c.l.b16 %v45
  %v190 = vunpack.c.l.b16 %v46
  %v191 = vunpack.c.l.b16 %v47
  %v192 = vunpack.c.l.b16 %v48
  %v193 = vunpack.c.l.b16 %v49
  %v194 = vunpack.c.l.b16 %v50
  %v195 = vunpack.c.l.b16 %v51
  %v196 = vunpack.c.l.b16 %v52
  %v197 = vunpack.c.l.b16 %v53
  %v198 = vunpack.c.l.b16 %v54
  %v199 = vunpack.c.l.b16 %v55
  %v200 = vunpack.c.l.b16 %v56
  %v201 = vunpack.c.l.b16 %v57
  %v202 = vunpack.c.l.b16 %v58
  %v203 = vunpack.c.l.b16 %v59
  %v204 = vunpack.c.l.b16 %v60
  %v205 = vunpack.c.l.b16 %v61
  %v206 = vunpack.c.l.b16 %v62
  %v207 = vunpack.c.l.b16 %v63
  %v208 = vunpack.c.l.b16 %v64
  %v209 = vunpack.c.l.b16 %v65
  %v210 = vunpack.c.l.b16 %v66
  %v211 = vunpack.c.l.b16 %v67
  %v212 = vunpack.c.l.b16 %v68
  %v213 = vunpack.c.l.b16 %v69
  %v214 = vunpack.c.l.b16 %v70
  %v215 = vunpack.c.l.b16 %v71
  %v216 = vunpack.c.l.b16 %v72
  %v217 = vunpack.c.l.b16 %v73
  %v218 = vunpack.c.l.b16 %v74
  %v219 = vunpack.c.l.b16 %v75
  %v220 = vunpack.c.l.b16 %v76
  %v221 = vunpack.c.l.b16 %v77
  %v222 = vpack.c.b16 %v159, %v158
  %v223 = vpack.c.b16 %v161, %v160
  %v224 = vpack.c.b16 %v163, %v162
  %v225 = vpack.c.b16 %v165, %v164
  %v226 = vpack.c.b16 %v167, %v166
  %v227 = vpack.c.b16 %v169, %v168
  %v228 = vpack.c.b16 %v171, %v170
  %v229 = vpack.c.b16 %v173, %v172
  %v230 = vpack.c.b16 %v175, %v174
  %v231 = vpack.c.b16 %v177, %v176
  %v232 = vpack.c.b16 %v179, %v178
  %v233 = vpack.c.b16 %v181, %v180
  %v234 = vpack.c.b16 %v183, %v182
  %v235 = vpack.c.b16 %v185, %v184
  %v236 = vpack.c.b16 %v187, %v186
  %v237 = vpack.c.b16 %v189, %v188
  %v238 = vpack.c.b16 %v191, %v190
  %v239 = vpack.c.b16 %v193, %v192
  %v240 = vpack.c.b16 %v195, %v194
  %v241 = vpack.c.b16 %v197, %v196
  %v242 = vpack.c.b16 %v199, %v198
  %v243 = vpack.c.b16 %v201, %v200
  %v244 = vpack.c.b16 %v203, %v202
  %v245 = vpack.c.b16 %v205, %v204
  %v246 = vpack.c.b16 %v207, %v206
  %v247 = vpack.c.b16 %v209, %v208
  %v248 = vpack.c.b16 %v211, %v210
  %v249 = vpack.c.b16 %v213, %v212
  %v250 = vpack.c.b16 %v215, %v214
  %v251 = vpack.c.b16 %v217, %v216
  %v252 = vpack.c.b16 %v219, %v218
  %v253 = vpack.c.b16 %v221, %v220
  %v302 = vunpack.c.l.b16 %v78
  %v303 = vunpack.c.l.b16 %v79
  %v304 = vunpack.c.l.b16 %v80
  %v305 = vunpack.c.l.b16 %v81
  %v306 = vunpack.c.l.b16 %v82
  %v307 = vunpack.c.l.b16 %v83
  %v308 = vunpack.c.l.b16 %v84
  %v309 = vunpack.c.l.b16 %v85
  %v310 = vunpack.c.l.b16 %v86
  %v311 = vunpack.c.l.b16 %v87
  %v312 = vunpack.c.l.b16 %v88
  %v313 = vunpack.c.l.b16 %v89
  %v314 = vunpack.c.l.b16 %v90
  %v315 = vunpack.c.l.b16 %v91
  %v316 = vunpack.c.l.b16 %v92
  %v317 = vunpack.c.l.b16 %v93
  %v318 = vpack.c.b16 %v303, %v302
  %v319 = vpack.c.b16 %v305, %v304
  %v320 = vpack.c.b16 %v307, %v306
  %v321 = vpack.c.b16 %v309, %v308
  %v322 = vpack.c.b16 %v311, %v310
  %v323 = vpack.c.b16 %v313, %v312
  %v324 = vpack.c.b16 %v315, %v314
  %v325 = vpack.c.b16 %v317, %v316
  %334 = vmatpush.bf16.msra.mxu0 %v325
  %335 = vmatpush.bf16.msra.mxu0 %v324
  %336 = vmatpush.bf16.msra.mxu0 %v323
  %337 = vmatpush.bf16.msra.mxu0 %v322
  %338 = vmatpush.bf16.msra.mxu0 %v321
  %339 = vmatpush.bf16.msra.mxu0 %v320
  %340 = vmatpush.bf16.msra.mxu0 %v319
  %341 = vmatpush.bf16.msra.mxu0 %v318
  %342 = vmatmul.bf16.gmra.mxu0 %v222
  %v343 = vpop.f32.mrf.mxu0
  %v344 = vadd.f32 0.0, %v343
  %v345 = vpop.f32.mrf.mxu0
  %v346 = vadd.f32 0.0, %v345
  %347 = vmatmul.bf16.gmra.mxu0 %v223
  %v348 = vpop.f32.mrf.mxu0
  %v349 = vadd.f32 0.0, %v348
  %v350 = vpop.f32.mrf.mxu0
  %v351 = vadd.f32 0.0, %v350
  %352 = vmatmul.bf16.gmra.mxu0 %v224
  %v353 = vpop.f32.mrf.mxu0
  %v354 = vadd.f32 0.0, %v353
  %v355 = vpop.f32.mrf.mxu0
  %v356 = vadd.f32 0.0, %v355
  %357 = vmatmul.bf16.gmra.mxu0 %v225
  %v358 = vpop.f32.mrf.mxu0
  %v359 = vadd.f32 0.0, %v358
  %v360 = vpop.f32.mrf.mxu0
  %v361 = vadd.f32 0.0, %v360
  %362 = vmatmul.bf16.gmra.mxu0 %v226
  %v363 = vpop.f32.mrf.mxu0
  %v364 = vadd.f32 0.0, %v363
  %v365 = vpop.f32.mrf.mxu0
  %v366 = vadd.f32 0.0, %v365
  %367 = vmatmul.bf16.gmra.mxu0 %v227
  %v368 = vpop.f32.mrf.mxu0
  %v369 = vadd.f32 0.0, %v368
  %v370 = vpop.f32.mrf.mxu0
  %v371 = vadd.f32 0.0, %v370
  %372 = vmatmul.bf16.gmra.mxu0 %v228
  %v373 = vpop.f32.mrf.mxu0
  %v374 = vadd.f32 0.0, %v373
  %v375 = vpop.f32.mrf.mxu0
  %v376 = vadd.f32 0.0, %v375
  %377 = vmatmul.bf16.gmra.mxu0 %v229
  %v378 = vpop.f32.mrf.mxu0
  %v379 = vadd.f32 0.0, %v378
  %v380 = vpop.f32.mrf.mxu0
  %v381 = vadd.f32 0.0, %v380
  %382 = vmatmul.bf16.gmra.mxu0 %v230
  %v383 = vpop.f32.mrf.mxu0
  %v384 = vadd.f32 0.0, %v383
  %v385 = vpop.f32.mrf.mxu0
  %v386 = vadd.f32 0.0, %v385
  %387 = vmatmul.bf16.gmra.mxu0 %v231
  %v388 = vpop.f32.mrf.mxu0
  %v389 = vadd.f32 0.0, %v388
  %v390 = vpop.f32.mrf.mxu0
  %v391 = vadd.f32 0.0, %v390
  %392 = vmatmul.bf16.gmra.mxu0 %v232
  %v393 = vpop.f32.mrf.mxu0
  %v394 = vadd.f32 0.0, %v393
  %v395 = vpop.f32.mrf.mxu0
  %v396 = vadd.f32 0.0, %v395
  %397 = vmatmul.bf16.gmra.mxu0 %v233
  %v398 = vpop.f32.mrf.mxu0
  %v399 = vadd.f32 0.0, %v398
  %v400 = vpop.f32.mrf.mxu0
  %v401 = vadd.f32 0.0, %v400
  %402 = vmatmul.bf16.gmra.mxu0 %v234
  %v403 = vpop.f32.mrf.mxu0
  %v404 = vadd.f32 0.0, %v403
  %v405 = vpop.f32.mrf.mxu0
  %v406 = vadd.f32 0.0, %v405
  %407 = vmatmul.bf16.gmra.mxu0 %v235
  %v408 = vpop.f32.mrf.mxu0
  %v409 = vadd.f32 0.0, %v408
  %v410 = vpop.f32.mrf.mxu0
  %v411 = vadd.f32 0.0, %v410
  %412 = vmatmul.bf16.gmra.mxu0 %v236
  %v413 = vpop.f32.mrf.mxu0
  %v414 = vadd.f32 0.0, %v413
  %v415 = vpop.f32.mrf.mxu0
  %v416 = vadd.f32 0.0, %v415
  %417 = vmatmul.bf16.gmra.mxu0 %v237
  %v418 = vpop.f32.mrf.mxu0
  %v419 = vadd.f32 0.0, %v418
  %v420 = vpop.f32.mrf.mxu0
  %v421 = vadd.f32 0.0, %v420
  %422 = vmatmul.bf16.gmra.mxu0 %v238
  %v423 = vpop.f32.mrf.mxu0
  %v424 = vadd.f32 0.0, %v423
  %v425 = vpop.f32.mrf.mxu0
  %v426 = vadd.f32 0.0, %v425
  %427 = vmatmul.bf16.gmra.mxu0 %v239
  %v428 = vpop.f32.mrf.mxu0
  %v429 = vadd.f32 0.0, %v428
  %v430 = vpop.f32.mrf.mxu0
  %v431 = vadd.f32 0.0, %v430
  %432 = vmatmul.bf16.gmra.mxu0 %v240
  %v433 = vpop.f32.mrf.mxu0
  %v434 = vadd.f32 0.0, %v433
  %v435 = vpop.f32.mrf.mxu0
  %v436 = vadd.f32 0.0, %v435
  %437 = vmatmul.bf16.gmra.mxu0 %v241
  %v438 = vpop.f32.mrf.mxu0
  %v439 = vadd.f32 0.0, %v438
  %v440 = vpop.f32.mrf.mxu0
  %v441 = vadd.f32 0.0, %v440
  %442 = vmatmul.bf16.gmra.mxu0 %v242
  %v443 = vpop.f32.mrf.mxu0
  %v444 = vadd.f32 0.0, %v443
  %v445 = vpop.f32.mrf.mxu0
  %v446 = vadd.f32 0.0, %v445
  %447 = vmatmul.bf16.gmra.mxu0 %v243
  %v448 = vpop.f32.mrf.mxu0
  %v449 = vadd.f32 0.0, %v448
  %v450 = vpop.f32.mrf.mxu0
  %v451 = vadd.f32 0.0, %v450
  %452 = vmatmul.bf16.gmra.mxu0 %v244
  %v453 = vpop.f32.mrf.mxu0
  %v454 = vadd.f32 0.0, %v453
  %v455 = vpop.f32.mrf.mxu0
  %v456 = vadd.f32 0.0, %v455
  %457 = vmatmul.bf16.gmra.mxu0 %v245
  %v458 = vpop.f32.mrf.mxu0
  %v459 = vadd.f32 0.0, %v458
  %v460 = vpop.f32.mrf.mxu0
  %v461 = vadd.f32 0.0, %v460
  %462 = vmatmul.bf16.gmra.mxu0 %v246
  %v463 = vpop.f32.mrf.mxu0
  %v464 = vadd.f32 0.0, %v463
  %v465 = vpop.f32.mrf.mxu0
  %v466 = vadd.f32 0.0, %v465
  %467 = vmatmul.bf16.gmra.mxu0 %v247
  %v468 = vpop.f32.mrf.mxu0
  %v469 = vadd.f32 0.0, %v468
  %v470 = vpop.f32.mrf.mxu0
  %v471 = vadd.f32 0.0, %v470
  %472 = vmatmul.bf16.gmra.mxu0 %v248
  %v473 = vpop.f32.mrf.mxu0
  %v474 = vadd.f32 0.0, %v473
  %v475 = vpop.f32.mrf.mxu0
  %v476 = vadd.f32 0.0, %v475
  %477 = vmatmul.bf16.gmra.mxu0 %v249
  %v478 = vpop.f32.mrf.mxu0
  %v479 = vadd.f32 0.0, %v478
  %v480 = vpop.f32.mrf.mxu0
  %v481 = vadd.f32 0.0, %v480
  %482 = vmatmul.bf16.gmra.mxu0 %v250
  %v483 = vpop.f32.mrf.mxu0
  %v484 = vadd.f32 0.0, %v483
  %v485 = vpop.f32.mrf.mxu0
  %v486 = vadd.f32 0.0, %v485
  %487 = vmatmul.bf16.gmra.mxu0 %v251
  %v488 = vpop.f32.mrf.mxu0
  %v489 = vadd.f32 0.0, %v488
  %v490 = vpop.f32.mrf.mxu0
  %v491 = vadd.f32 0.0, %v490
  %492 = vmatmul.bf16.gmra.mxu0 %v252
  %v493 = vpop.f32.mrf.mxu0
  %v494 = vadd.f32 0.0, %v493
  %v495 = vpop.f32.mrf.mxu0
  %v496 = vadd.f32 0.0, %v495
  %497 = vmatmul.bf16.gmra.mxu0 %v253
  %v498 = vpop.f32.mrf.mxu0
  %v499 = vadd.f32 0.0, %v498
  %v500 = vpop.f32.mrf.mxu0
  %v501 = vadd.f32 0.0, %v500
  %502 = vdwg.mxu0
  %v503 = vld [vmem:[%s2] sm:$0x1]
  %v505 = vperm.slane %v503, 0
  %vm507 = vcmp.ge.f32.partialorder %v344, %v505
  %vm508 = vcmp.ge.f32.partialorder %v346, %v505
  %vm509 = vcmp.ge.f32.partialorder %v349, %v505
  %vm510 = vcmp.ge.f32.partialorder %v351, %v505
  %vm511 = vcmp.ge.f32.partialorder %v354, %v505
  %vm512 = vcmp.ge.f32.partialorder %v356, %v505
  %vm513 = vcmp.ge.f32.partialorder %v359, %v505
  %vm514 = vcmp.ge.f32.partialorder %v361, %v505
  %vm515 = vcmp.ge.f32.partialorder %v364, %v505
  %vm516 = vcmp.ge.f32.partialorder %v366, %v505
  %vm517 = vcmp.ge.f32.partialorder %v369, %v505
  %vm518 = vcmp.ge.f32.partialorder %v371, %v505
  %vm519 = vcmp.ge.f32.partialorder %v374, %v505
  %vm520 = vcmp.ge.f32.partialorder %v376, %v505
  %vm521 = vcmp.ge.f32.partialorder %v379, %v505
  %vm522 = vcmp.ge.f32.partialorder %v381, %v505
  %vm523 = vcmp.ge.f32.partialorder %v384, %v505
  %vm524 = vcmp.ge.f32.partialorder %v386, %v505
  %vm525 = vcmp.ge.f32.partialorder %v389, %v505
  %vm526 = vcmp.ge.f32.partialorder %v391, %v505
  %vm527 = vcmp.ge.f32.partialorder %v394, %v505
  %vm528 = vcmp.ge.f32.partialorder %v396, %v505
  %vm529 = vcmp.ge.f32.partialorder %v399, %v505
  %vm530 = vcmp.ge.f32.partialorder %v401, %v505
  %vm531 = vcmp.ge.f32.partialorder %v404, %v505
  %vm532 = vcmp.ge.f32.partialorder %v406, %v505
  %vm533 = vcmp.ge.f32.partialorder %v409, %v505
  %vm534 = vcmp.ge.f32.partialorder %v411, %v505
  %vm535 = vcmp.ge.f32.partialorder %v414, %v505
  %vm536 = vcmp.ge.f32.partialorder %v416, %v505
  %vm537 = vcmp.ge.f32.partialorder %v419, %v505
  %vm538 = vcmp.ge.f32.partialorder %v421, %v505
  %vm539 = vcmp.ge.f32.partialorder %v424, %v505
  %vm540 = vcmp.ge.f32.partialorder %v426, %v505
  %vm541 = vcmp.ge.f32.partialorder %v429, %v505
  %vm542 = vcmp.ge.f32.partialorder %v431, %v505
  %vm543 = vcmp.ge.f32.partialorder %v434, %v505
  %vm544 = vcmp.ge.f32.partialorder %v436, %v505
  %vm545 = vcmp.ge.f32.partialorder %v439, %v505
  %vm546 = vcmp.ge.f32.partialorder %v441, %v505
  %vm547 = vcmp.ge.f32.partialorder %v444, %v505
  %vm548 = vcmp.ge.f32.partialorder %v446, %v505
  %vm549 = vcmp.ge.f32.partialorder %v449, %v505
  %vm550 = vcmp.ge.f32.partialorder %v451, %v505
  %vm551 = vcmp.ge.f32.partialorder %v454, %v505
  %vm552 = vcmp.ge.f32.partialorder %v456, %v505
  %vm553 = vcmp.ge.f32.partialorder %v459, %v505
  %vm554 = vcmp.ge.f32.partialorder %v461, %v505
  %vm555 = vcmp.ge.f32.partialorder %v464, %v505
  %vm556 = vcmp.ge.f32.partialorder %v466, %v505
  %vm557 = vcmp.ge.f32.partialorder %v469, %v505
  %vm558 = vcmp.ge.f32.partialorder %v471, %v505
  %vm559 = vcmp.ge.f32.partialorder %v474, %v505
  %vm560 = vcmp.ge.f32.partialorder %v476, %v505
  %vm561 = vcmp.ge.f32.partialorder %v479, %v505
  %vm562 = vcmp.ge.f32.partialorder %v481, %v505
  %vm563 = vcmp.ge.f32.partialorder %v484, %v505
  %vm564 = vcmp.ge.f32.partialorder %v486, %v505
  %vm565 = vcmp.ge.f32.partialorder %v489, %v505
  %vm566 = vcmp.ge.f32.partialorder %v491, %v505
  %vm567 = vcmp.ge.f32.partialorder %v494, %v505
  %vm568 = vcmp.ge.f32.partialorder %v496, %v505
  %vm569 = vcmp.ge.f32.partialorder %v499, %v505
  %vm570 = vcmp.ge.f32.partialorder %v501, %v505
  %v571 = vsel %vm507, 1, 0
  %v572 = vsel %vm508, 1, 0
  %v573 = vsel %vm509, 1, 0
  %v574 = vsel %vm510, 1, 0
  %v575 = vsel %vm511, 1, 0
  %v576 = vsel %vm512, 1, 0
  %v577 = vsel %vm513, 1, 0
  %v578 = vsel %vm514, 1, 0
  %v579 = vsel %vm515, 1, 0
  %v580 = vsel %vm516, 1, 0
  %v581 = vsel %vm517, 1, 0
  %v582 = vsel %vm518, 1, 0
  %v583 = vsel %vm519, 1, 0
  %v584 = vsel %vm520, 1, 0
  %v585 = vsel %vm521, 1, 0
  %v586 = vsel %vm522, 1, 0
  %v587 = vsel %vm523, 1, 0
  %v588 = vsel %vm524, 1, 0
  %v589 = vsel %vm525, 1, 0
  %v590 = vsel %vm526, 1, 0
  %v591 = vsel %vm527, 1, 0
  %v592 = vsel %vm528, 1, 0
  %v593 = vsel %vm529, 1, 0
  %v594 = vsel %vm530, 1, 0
  %v595 = vsel %vm531, 1, 0
  %v596 = vsel %vm532, 1, 0
  %v597 = vsel %vm533, 1, 0
  %v598 = vsel %vm534, 1, 0
  %v599 = vsel %vm535, 1, 0
  %v600 = vsel %vm536, 1, 0
  %v601 = vsel %vm537, 1, 0
  %v602 = vsel %vm538, 1, 0
  %v603 = vsel %vm539, 1, 0
  %v604 = vsel %vm540, 1, 0
  %v605 = vsel %vm541, 1, 0
  %v606 = vsel %vm542, 1, 0
  %v607 = vsel %vm543, 1, 0
  %v608 = vsel %vm544, 1, 0
  %v609 = vsel %vm545, 1, 0
  %v610 = vsel %vm546, 1, 0
  %v611 = vsel %vm547, 1, 0
  %v612 = vsel %vm548, 1, 0
  %v613 = vsel %vm549, 1, 0
  %v614 = vsel %vm550, 1, 0
  %v615 = vsel %vm551, 1, 0
  %v616 = vsel %vm552, 1, 0
  %v617 = vsel %vm553, 1, 0
  %v618 = vsel %vm554, 1, 0
  %v619 = vsel %vm555, 1, 0
  %v620 = vsel %vm556, 1, 0
  %v621 = vsel %vm557, 1, 0
  %v622 = vsel %vm558, 1, 0
  %v623 = vsel %vm559, 1, 0
  %v624 = vsel %vm560, 1, 0
  %v625 = vsel %vm561, 1, 0
  %v626 = vsel %vm562, 1, 0
  %v627 = vsel %vm563, 1, 0
  %v628 = vsel %vm564, 1, 0
  %v629 = vsel %vm565, 1, 0
  %v630 = vsel %vm566, 1, 0
  %v631 = vsel %vm567, 1, 0
  %v632 = vsel %vm568, 1, 0
  %v633 = vsel %vm569, 1, 0
  %v634 = vsel %vm570, 1, 0
  %v635 = vcvt.s32.f32 %v571
  %v636 = vcvt.s32.f32 %v572
  %v637 = vcvt.s32.f32 %v573
  %v638 = vcvt.s32.f32 %v574
  %v639 = vcvt.s32.f32 %v575
  %v640 = vcvt.s32.f32 %v576
  %v641 = vcvt.s32.f32 %v577
  %v642 = vcvt.s32.f32 %v578
  %v643 = vcvt.s32.f32 %v579
  %v644 = vcvt.s32.f32 %v580
  %v645 = vcvt.s32.f32 %v581
  %v646 = vcvt.s32.f32 %v582
  %v647 = vcvt.s32.f32 %v583
  %v648 = vcvt.s32.f32 %v584
  %v649 = vcvt.s32.f32 %v585
  %v650 = vcvt.s32.f32 %v586
  %v651 = vcvt.s32.f32 %v587
  %v652 = vcvt.s32.f32 %v588
  %v653 = vcvt.s32.f32 %v589
  %v654 = vcvt.s32.f32 %v590
  %v655 = vcvt.s32.f32 %v591
  %v656 = vcvt.s32.f32 %v592
  %v657 = vcvt.s32.f32 %v593
  %v658 = vcvt.s32.f32 %v594
  %v659 = vcvt.s32.f32 %v595
  %v660 = vcvt.s32.f32 %v596
  %v661 = vcvt.s32.f32 %v597
  %v662 = vcvt.s32.f32 %v598
  %v663 = vcvt.s32.f32 %v599
  %v664 = vcvt.s32.f32 %v600
  %v665 = vcvt.s32.f32 %v601
  %v666 = vcvt.s32.f32 %v602
  %v667 = vcvt.s32.f32 %v603
  %v668 = vcvt.s32.f32 %v604
  %v669 = vcvt.s32.f32 %v605
  %v670 = vcvt.s32.f32 %v606
  %v671 = vcvt.s32.f32 %v607
  %v672 = vcvt.s32.f32 %v608
  %v673 = vcvt.s32.f32 %v609
  %v674 = vcvt.s32.f32 %v610
  %v675 = vcvt.s32.f32 %v611
  %v676 = vcvt.s32.f32 %v612
  %v677 = vcvt.s32.f32 %v613
  %v678 = vcvt.s32.f32 %v614
  %v679 = vcvt.s32.f32 %v615
  %v680 = vcvt.s32.f32 %v616
  %v681 = vcvt.s32.f32 %v617
  %v682 = vcvt.s32.f32 %v618
  %v683 = vcvt.s32.f32 %v619
  %v684 = vcvt.s32.f32 %v620
  %v685 = vcvt.s32.f32 %v621
  %v686 = vcvt.s32.f32 %v622
  %v687 = vcvt.s32.f32 %v623
  %v688 = vcvt.s32.f32 %v624
  %v689 = vcvt.s32.f32 %v625
  %v690 = vcvt.s32.f32 %v626
  %v691 = vcvt.s32.f32 %v627
  %v692 = vcvt.s32.f32 %v628
  %v693 = vcvt.s32.f32 %v629
  %v694 = vcvt.s32.f32 %v630
  %v695 = vcvt.s32.f32 %v631
  %v696 = vcvt.s32.f32 %v632
  %v697 = vcvt.s32.f32 %v633
  %v698 = vcvt.s32.f32 %v634
  %v699 = vpack.c.bf16 %v635, %v635
  %v700 = vpack.c.bf16 %v636, %v636
  %v701 = vpack.c.bf16 %v637, %v637
  %v702 = vpack.c.bf16 %v638, %v638
  %v703 = vpack.c.bf16 %v639, %v639
  %v704 = vpack.c.bf16 %v640, %v640
  %v705 = vpack.c.bf16 %v641, %v641
  %v706 = vpack.c.bf16 %v642, %v642
  %v707 = vpack.c.bf16 %v643, %v643
  %v708 = vpack.c.bf16 %v644, %v644
  %v709 = vpack.c.bf16 %v645, %v645
  %v710 = vpack.c.bf16 %v646, %v646
  %v711 = vpack.c.bf16 %v647, %v647
  %v712 = vpack.c.bf16 %v648, %v648
  %v713 = vpack.c.bf16 %v649, %v649
  %v714 = vpack.c.bf16 %v650, %v650
  %v715 = vpack.c.bf16 %v651, %v651
  %v716 = vpack.c.bf16 %v652, %v652
  %v717 = vpack.c.bf16 %v653, %v653
  %v718 = vpack.c.bf16 %v654, %v654
  %v719 = vpack.c.bf16 %v655, %v655
  %v720 = vpack.c.bf16 %v656, %v656
  %v721 = vpack.c.bf16 %v657, %v657
  %v722 = vpack.c.bf16 %v658, %v658
  %v723 = vpack.c.bf16 %v659, %v659
  %v724 = vpack.c.bf16 %v660, %v660
  %v725 = vpack.c.bf16 %v661, %v661
  %v726 = vpack.c.bf16 %v662, %v662
  %v727 = vpack.c.bf16 %v663, %v663
  %v728 = vpack.c.bf16 %v664, %v664
  %v729 = vpack.c.bf16 %v665, %v665
  %v730 = vpack.c.bf16 %v666, %v666
  %v731 = vpack.c.bf16 %v667, %v667
  %v732 = vpack.c.bf16 %v668, %v668
  %v733 = vpack.c.bf16 %v669, %v669
  %v734 = vpack.c.bf16 %v670, %v670
  %v735 = vpack.c.bf16 %v671, %v671
  %v736 = vpack.c.bf16 %v672, %v672
  %v737 = vpack.c.bf16 %v673, %v673
  %v738 = vpack.c.bf16 %v674, %v674
  %v739 = vpack.c.bf16 %v675, %v675
  %v740 = vpack.c.bf16 %v676, %v676
  %v741 = vpack.c.bf16 %v677, %v677
  %v742 = vpack.c.bf16 %v678, %v678
  %v743 = vpack.c.bf16 %v679, %v679
  %v744 = vpack.c.bf16 %v680, %v680
  %v745 = vpack.c.bf16 %v681, %v681
  %v746 = vpack.c.bf16 %v682, %v682
  %v747 = vpack.c.bf16 %v683, %v683
  %v748 = vpack.c.bf16 %v684, %v684
  %v749 = vpack.c.bf16 %v685, %v685
  %v750 = vpack.c.bf16 %v686, %v686
  %v751 = vpack.c.bf16 %v687, %v687
  %v752 = vpack.c.bf16 %v688, %v688
  %v753 = vpack.c.bf16 %v689, %v689
  %v754 = vpack.c.bf16 %v690, %v690
  %v755 = vpack.c.bf16 %v691, %v691
  %v756 = vpack.c.bf16 %v692, %v692
  %v757 = vpack.c.bf16 %v693, %v693
  %v758 = vpack.c.bf16 %v694, %v694
  %v759 = vpack.c.bf16 %v695, %v695
  %v760 = vpack.c.bf16 %v696, %v696
  %v761 = vpack.c.bf16 %v697, %v697
  %v762 = vpack.c.bf16 %v698, %v698
  %763 = vst [vmem:[%s3] sm:$0xf] %v699
  %764 = vst [vmem:[%s3 + $0x4] sm:$0xf] %v700
  %765 = vst [vmem:[%s3 + $0x8] sm:$0xf] %v701
  %766 = vst [vmem:[%s3 + $0xc] sm:$0xf] %v702
  %767 = vst [vmem:[%s3 + $0x10] sm:$0xf] %v703
  %768 = vst [vmem:[%s3 + $0x14] sm:$0xf] %v704
  %769 = vst [vmem:[%s3 + $0x18] sm:$0xf] %v705
  %770 = vst [vmem:[%s3 + $0x1c] sm:$0xf] %v706
  %771 = vst [vmem:[%s3 + $0x20] sm:$0xf] %v707
  %772 = vst [vmem:[%s3 + $0x24] sm:$0xf] %v708
  %773 = vst [vmem:[%s3 + $0x28] sm:$0xf] %v709
  %774 = vst [vmem:[%s3 + $0x2c] sm:$0xf] %v710
  %775 = vst [vmem:[%s3 + $0x30] sm:$0xf] %v711
  %776 = vst [vmem:[%s3 + $0x34] sm:$0xf] %v712
  %777 = vst [vmem:[%s3 + $0x38] sm:$0xf] %v713
  %778 = vst [vmem:[%s3 + $0x3c] sm:$0xf] %v714
  %779 = vst [vmem:[%s3 + $0x40] sm:$0xf] %v715
  %780 = vst [vmem:[%s3 + $0x44] sm:$0xf] %v716
  %781 = vst [vmem:[%s3 + $0x48] sm:$0xf] %v717
  %782 = vst [vmem:[%s3 + $0x4c] sm:$0xf] %v718
  %783 = vst [vmem:[%s3 + $0x50] sm:$0xf] %v719
  %784 = vst [vmem:[%s3 + $0x54] sm:$0xf] %v720
  %785 = vst [vmem:[%s3 + $0x58] sm:$0xf] %v721
  %786 = vst [vmem:[%s3 + $0x5c] sm:$0xf] %v722
  %787 = vst [vmem:[%s3 + $0x60] sm:$0xf] %v723
  %788 = vst [vmem:[%s3 + $0x64] sm:$0xf] %v724
  %789 = vst [vmem:[%s3 + $0x68] sm:$0xf] %v725
  %790 = vst [vmem:[%s3 + $0x6c] sm:$0xf] %v726
  %791 = vst [vmem:[%s3 + $0x70] sm:$0xf] %v727
  %792 = vst [vmem:[%s3 + $0x74] sm:$0xf] %v728
  %793 = vst [vmem:[%s3 + $0x78] sm:$0xf] %v729
  %794 = vst [vmem:[%s3 + $0x7c] sm:$0xf] %v730
  %795 = vst [vmem:[%s3 + $0x80] sm:$0xf] %v731
  %796 = vst [vmem:[%s3 + $0x84] sm:$0xf] %v732
  %797 = vst [vmem:[%s3 + $0x88] sm:$0xf] %v733
  %798 = vst [vmem:[%s3 + $0x8c] sm:$0xf] %v734
  %799 = vst [vmem:[%s3 + $0x90] sm:$0xf] %v735
  %800 = vst [vmem:[%s3 + $0x94] sm:$0xf] %v736
  %801 = vst [vmem:[%s3 + $0x98] sm:$0xf] %v737
  %802 = vst [vmem:[%s3 + $0x9c] sm:$0xf] %v738
  %803 = vst [vmem:[%s3 + $0xa0] sm:$0xf] %v739
  %804 = vst [vmem:[%s3 + $0xa4] sm:$0xf] %v740
  %805 = vst [vmem:[%s3 + $0xa8] sm:$0xf] %v741
  %806 = vst [vmem:[%s3 + $0xac] sm:$0xf] %v742
  %807 = vst [vmem:[%s3 + $0xb0] sm:$0xf] %v743
  %808 = vst [vmem:[%s3 + $0xb4] sm:$0xf] %v744
  %809 = vst [vmem:[%s3 + $0xb8] sm:$0xf] %v745
  %810 = vst [vmem:[%s3 + $0xbc] sm:$0xf] %v746
  %811 = vst [vmem:[%s3 + $0xc0] sm:$0xf] %v747
  %812 = vst [vmem:[%s3 + $0xc4] sm:$0xf] %v748
  %813 = vst [vmem:[%s3 + $0xc8] sm:$0xf] %v749
  %814 = vst [vmem:[%s3 + $0xcc] sm:$0xf] %v750
  %815 = vst [vmem:[%s3 + $0xd0] sm:$0xf] %v751
  %816 = vst [vmem:[%s3 + $0xd4] sm:$0xf] %v752
  %817 = vst [vmem:[%s3 + $0xd8] sm:$0xf] %v753
  %818 = vst [vmem:[%s3 + $0xdc] sm:$0xf] %v754
  %819 = vst [vmem:[%s3 + $0xe0] sm:$0xf] %v755
  %820 = vst [vmem:[%s3 + $0xe4] sm:$0xf] %v756
  %821 = vst [vmem:[%s3 + $0xe8] sm:$0xf] %v757
  %822 = vst [vmem:[%s3 + $0xec] sm:$0xf] %v758
  %823 = vst [vmem:[%s3 + $0xf0] sm:$0xf] %v759
  %824 = vst [vmem:[%s3 + $0xf4] sm:$0xf] %v760
  %825 = vst [vmem:[%s3 + $0xf8] sm:$0xf] %v761
  %826 = vst [vmem:[%s3 + $0xfc] sm:$0xf] %v762
  // Predicated region
  $region14: #{spiking_wrapper_forward.1} parent=0 // pred_check
    _
  $region15: #{spiking_wrapper_forward.1} parent=0 // pred_check_branch
    %828 = sbr.rel (0) target = $region17
  $region16: #{spiking_wrapper_forward.1} parent=0 // pred_region
    _
  $region17: #{spiking_wrapper_forward.1} parent=0 // pred_fallthru
    _
  // Predicated region
  $region18: #{spiking_wrapper_forward.1} parent=0 // pred_check
    _
  $region19: #{spiking_wrapper_forward.1} parent=0 // pred_check_branch
    %830 = sbr.rel (0) target = $region21
  $region20: #{spiking_wrapper_forward.1} parent=0 // pred_region
    _
  $region21: #{spiking_wrapper_forward.1} parent=0 // pred_fallthru
    _

</llo_original>
